<compile_context>
chip_gen: v5e
topology: v5e:2x2
jax: 0.10.0
libtpu: 0.0.40
codegen_flags: <defaults>
</compile_context>

<pallas_src>
import jax
import jax.numpy as jnp
from jax.experimental import pallas as pl
from jax.experimental.pallas import tpu as pltpu

_LANES = 128
_MAX_COLS = 4096                       # widest lane-dense slab we try for
# ~1.5M elements per block: 6 MiB f32 / 3 MiB bf16. Keeps the f32 intermediate
# footprint constant across input dtypes and amortizes per-grid-step overhead
# (important on v7x where a 2 MiB block streams in ~1.3 us vs ~0.35 us overhead).
_TARGET_BLOCK_ELEMS = 1_572_864
# 4x block (double-buffered in+out) + ~2 f32-block intermediates stays < 48 MiB.
_VMEM_LIMIT_BYTES = 48 * 1024 * 1024


def _round_down(v: int, m: int) -> int:
    return (v // m) * m


def _gelu_kernel(x_ref, o_ref):
    # f32 internal compute (required on v5e VPU/EUP; free since HBM-bound).
    xf = x_ref[...].astype(jnp.float32)
    o_ref[...] = (xf * jax.nn.sigmoid(1.702 * xf)).astype(o_ref.dtype)


def _pick_cols(n: int):
    """Widest multiple of 128 (<= _MAX_COLS) that divides n, else None."""
    if n >= _LANES:
        for c in range(_MAX_COLS, _LANES - 1, -_LANES):
            if n % c == 0:
                return c
    return None


def _compiler_params():
    return pltpu.CompilerParams(
        # "parallel" lets the runtime shard the row grid across both v7x TCs
        # (megacore); harmless elsewhere.
        dimension_semantics=("parallel",),
        vmem_limit_bytes=_VMEM_LIMIT_BYTES,
    )


def _gelu_2d(x_flat: jax.Array, n: int, cols: int, dtype, itemsize: int) -> jax.Array:
    """Fast path: lane-dense (rows, cols) slab, cols % 128 == 0, no padding."""
    rows = n // cols
    x2d = x_flat.reshape(rows, cols)  # contiguous reshape, no extra HBM pass

    # Sublane packing: 8 rows/vreg (32-bit), 16 (16-bit), 32 (8-bit).
    packing = 8 * max(1, 4 // itemsize)

    desired_rows = max(packing, _TARGET_BLOCK_ELEMS // cols)
    block_rows = min(rows, desired_rows)
    if block_rows < rows:
        block_rows = max(packing, _round_down(block_rows, packing))

    # v7x has 2 TensorCores: for decent-sized tensors make sure the parallel
    # grid axis has >= 2 (>= 4 when large) steps so both cores get work.
    total_bytes = n * itemsize
    min_grid = 1
    if total_bytes >= (4 << 20) and rows >= 8 * packing:
        min_grid = 4
    elif total_bytes >= (1 << 20) and rows >= 2 * packing:
        min_grid = 2
    if min_grid > 1:
        cap = max(packing, _round_down(pl.cdiv(rows, min_grid), packing))
        block_rows = min(block_rows, cap)

    grid_m = pl.cdiv(rows, block_rows)  # partial last block handled by Pallas masking

    out2d = pl.pallas_call(
        _gelu_kernel,
        out_shape=jax.ShapeDtypeStruct((rows, cols), dtype),
        grid=(grid_m,),
        in_specs=[pl.BlockSpec((block_rows, cols), lambda i: (i, 0))],
        out_specs=pl.BlockSpec((block_rows, cols), lambda i: (i, 0)),
        compiler_params=_compiler_params(),
    )(x2d)
    return out2d.reshape(-1)


def _gelu_1d(x_flat: jax.Array, n: int, dtype, itemsize: int) -> jax.Array:
    """Fallback for sizes that don't factor into a lane-dense slab.

    No jnp.pad / slice (which would add two full HBM passes): the flat array is
    processed with 1-D blocks whose length is a multiple of one fully packed
    (sublane, lane) tile; Pallas masks the partial last block, and since the op
    is elementwise the garbage in masked positions is never written back.
    """
    # One fully packed tile row-group: 1024 elems (f32) / 2048 (bf16) / 4096 (i8).
    sub_mult = _LANES * 8 * max(1, 4 // itemsize)
    if n <= sub_mult:
        block_len = n  # full-extent block is always legal
    else:
        block_len = max(sub_mult, _round_down(min(n, _TARGET_BLOCK_ELEMS), sub_mult))
    grid = pl.cdiv(n, block_len)

    return pl.pallas_call(
        _gelu_kernel,
        out_shape=jax.ShapeDtypeStruct((n,), dtype),
        grid=(grid,),
        in_specs=[pl.BlockSpec((block_len,), lambda i: (i,))],
        out_specs=pl.BlockSpec((block_len,), lambda i: (i,)),
        compiler_params=_compiler_params(),
    )(x_flat)


def gelu_pallas(x: jax.Array) -> jax.Array:
    """Elementwise GELU (x * sigmoid(1.702 x)) via a Pallas TPU kernel."""
    orig_shape = x.shape
    dtype = x.dtype
    n = x.size
    if n == 0:
        return x

    itemsize = jnp.dtype(dtype).itemsize
    x_flat = jnp.ravel(x)  # contiguous reshape only; no extra HBM pass

    cols = _pick_cols(n)
    if cols is not None:
        out_flat = _gelu_2d(x_flat, n, cols, dtype, itemsize)
    else:
        out_flat = _gelu_1d(x_flat, n, dtype, itemsize)
    return out_flat.reshape(orig_shape)


def gelu_ref(x: jax.Array) -> jax.Array:
    xf = x.astype(jnp.float32)
    return (xf * jax.nn.sigmoid(1.702 * xf)).astype(x.dtype)


if __name__ == "__main__":
    key = jax.random.PRNGKey(0)
    k1, k2, k3, k4, k5 = jax.random.split(key, 5)

    # Small NCHW input consistent with typical conv activations (2-D fast path).
    x = jax.random.normal(k1, (2, 4, 16, 16), dtype=jnp.float32)
    y = gelu_pallas(x)
    jax.block_until_ready(y)
    assert y.shape == x.shape and y.dtype == x.dtype
    assert jnp.allclose(y, gelu_ref(x), atol=1e-5, rtol=1e-5)

    # Moderate tensor: exercises multi-block grid and the min-grid (>=2) split
    # that keeps both v7x TensorCores busy.
    x_big = jax.random.normal(k2, (8, 8, 32, 128), dtype=jnp.float32)
    y_big = gelu_pallas(x_big)
    jax.block_until_ready(y_big)
    assert jnp.allclose(y_big, gelu_ref(x_big), atol=1e-5, rtol=1e-5)

    # Awkward size: no lane-dense factorization -> flat 1-D path with a masked
    # partial last block (no pad / slice HBM passes).
    x_odd = jax.random.normal(k3, (3, 5, 7, 11), dtype=jnp.float32)
    y_odd = gelu_pallas(x_odd)
    jax.block_until_ready(y_odd)
    assert y_odd.shape == x_odd.shape
    assert jnp.allclose(y_odd, gelu_ref(x_odd), atol=1e-5, rtol=1e-5)

    # Tiny tensor (< 128 elements) -> single full-extent 1-D block.
    x_tiny = jax.random.normal(k4, (3, 7), dtype=jnp.float32)
    y_tiny = gelu_pallas(x_tiny)
    jax.block_until_ready(y_tiny)
    assert jnp.allclose(y_tiny, gelu_ref(x_tiny), atol=1e-5, rtol=1e-5)

    # bf16 path (f32 internal compute).
    x_bf16 = jax.random.normal(k5, (2, 4, 16, 16), dtype=jnp.bfloat16)
    y_bf16 = gelu_pallas(x_bf16)
    jax.block_until_ready(y_bf16)
    assert y_bf16.dtype == jnp.bfloat16
    assert jnp.allclose(
        y_bf16.astype(jnp.float32),
        gelu_ref(x_bf16).astype(jnp.float32),
        atol=2e-2,
        rtol=2e-2,
    )

    print("KERNEL_OK")
</pallas_src>

<mosaic_0001>
module attributes {stable_mosaic.version = 11 : i64} {
  func.func @_gelu_kernel(%arg0: i32, %arg1: memref<1x2048xf32, #tpu.memory_space<vmem>>, %arg2: memref<1x2048xf32, #tpu.memory_space<vmem>>) attributes {dimension_semantics = [#tpu.dimension_semantics<parallel>], iteration_bounds = array<i64: 1>, scalar_prefetch = 0 : i64, scratch_operands = 0 : i64, tpu.core_type = #tpu.core_type<tc>, window_params = [{transform_indices = @transform_0, window_bounds = array<i64: 1, 2048>}, {transform_indices = @transform_1, window_bounds = array<i64: 1, 2048>}]} {
    %c0 = arith.constant 0 : index
    %c0_0 = arith.constant 0 : index
    %0 = vector.load %arg1[%c0, %c0_0] : memref<1x2048xf32, #tpu.memory_space<vmem>>, vector<1x2048xf32>
    %cst = arith.constant 1.702000e+00 : f32
    %1 = vector.broadcast %cst : f32 to vector<1x2048xf32>
    %2 = arith.mulf %1, %0 : vector<1x2048xf32>
    %3 = arith.negf %2 : vector<1x2048xf32>
    %4 = math.exp %3 : vector<1x2048xf32>
    %cst_1 = arith.constant 1.000000e+00 : f32
    %5 = vector.broadcast %cst_1 : f32 to vector<1x2048xf32>
    %6 = arith.addf %5, %4 : vector<1x2048xf32>
    %7 = arith.divf %5, %6 : vector<1x2048xf32>
    %8 = arith.mulf %0, %7 : vector<1x2048xf32>
    %c0_2 = arith.constant 0 : index
    %c0_3 = arith.constant 0 : index
    %9 = vector.load %arg2[%c0_2, %c0_3] : memref<1x2048xf32, #tpu.memory_space<vmem>>, vector<1x2048xf32>
    tpu.vector_store %arg2[%c0_2, %c0_3], %8 {strides = array<i32>} : memref<1x2048xf32, #tpu.memory_space<vmem>>, vector<1x2048xf32>,
    return
  }
  func.func @transform_0(%arg0: i32) -> (i32, i32) {
    %c0_i32 = arith.constant 0 : i32
    %c0_i32_0 = arith.constant 0 : i32
    return %arg0, %c0_i32 : i32, i32
  }
  func.func @transform_1(%arg0: i32) -> (i32, i32) {
    %c0_i32 = arith.constant 0 : i32
    %c0_i32_0 = arith.constant 0 : i32
    return %arg0, %c0_i32 : i32, i32
  }
}

</mosaic_0001>

<llo_original>
// kernel: tpu_custom_call.1
$region0: #{tpu_custom_call.1}
  #allocation0 [shape = 'u32[]', space=smem, size = 0x4, offset = 0x4, fixed_abs, tag = 'smem constant byte address 0x4 - core index']
  #allocation1 [shape = 'u32[72,128]{1,0:T(1,128)}', space=vmem, size = 0x9000, scoped, tag = 'internal scratch']
  %s0 = inlined_call_operand.hbm [shape: f32[1,2048], index: 0, kind: input, shape index: {}]
  %s1 = inlined_call_operand.hbm [shape: f32[1,2048], index: 1, kind: output, shape index: {}]
  %s2 = sld [smem:[#allocation0]]
  $region18: #{tpu_custom_call.1} parent=0
    _
  %s4 = ssub.s32 1, %s2
  %s5 = scalar_select 0, %s4, %s2
  $region1: #{tpu_custom_call.1} parent=0
    #allocation2 [shape = 'u8[8192]{0}', space=vmem, size = 0x2000, scoped, tag = 'input window, operand 0, single buffered']
    #allocation3 [shape = 's32[1]{0}', space=sflag, size = 0x4, scoped, tag = 'scoped memory for tpu_custom_call.1']
    #allocation4 [shape = 's32[1]{0}', space=sflag, size = 0x4, scoped, tag = 'scoped memory for tpu_custom_call.1']
    #allocation5 [shape = 'u8[8192]{0}', space=vmem, size = 0x2000, scoped, tag = 'output window, operand 0, single buffered']
    %6 = vsyncpa [#allocation3], 0
    %7 = vsyncpa [#allocation4], 0
    // Predicated region
    $region2: #{tpu_custom_call.1} parent=1 // pred_check
      _
    $region3: #{tpu_custom_call.1} parent=1 // pred_check_branch
      %9 = sbr.rel (0) target = $region5
    $region4: #{tpu_custom_call.1} parent=1 // pred_region
      %11 = vsyncadd [#allocation3], 0
      %s13 = sshll.u32 %s0, 4
      %s14 = int_to_ptr.hbm [resolvable:$true] %s13
      %s15 = sshll.u32 [#allocation2], 4
      %s16 = int_to_ptr.vmem [resolvable:$true] %s15
      %18 = dma.hbm_to_vmem [thread:$0]  %s14, 256, %s16, [#allocation3]
    $region5: #{tpu_custom_call.1} parent=1 // pred_fallthru
      _
    // Predicated region
    $region6: #{tpu_custom_call.1} parent=1 // pred_check
      _
    $region7: #{tpu_custom_call.1} parent=1 // pred_check_branch
      %20 = sbr.rel (0) target = $region9
    $region8: #{tpu_custom_call.1} parent=1 // pred_region
      %22 = dma.done [#allocation3], 256
    $region9: #{tpu_custom_call.1} parent=1 // pred_fallthru
      _
    %v23 = vld [vmem:[#allocation2] sm:$0xff]
    %v24 = vld [vmem:[#allocation2 + $0x8] sm:$0xff]
    %v25 = vmul.f32 %v23, 1.702
    %v26 = vmul.f32 %v24, 1.702
    %v27 = vxor.u32 %v25, 2147483648
    %v28 = vxor.u32 %v26, 2147483648
    %v29 = vmul.f32 %v27, 1.442695
    %v30 = vpow.pop %v29
    %v31 = vmul.f32 %v28, 1.442695
    %v32 = vpow.pop %v31
    %v33 = vadd.f32 %v30, 1.0
    %v34 = vadd.f32 %v32, 1.0
    %v35 = vrcp.pop %v33
    %v36 = vmul.f32 %v33, %v35
    %v37 = vsub.f32 1.0, %v36
    %v38 = vmul.f32 %v35, %v37
    %v39 = vadd.f32 %v35, %v38
    %vm40 = vweird.f32 %v33
    %vm41 = vweird.f32 %v35
    %vm42 = vmor %vm40, %vm41
    %v43 = vsel %vm42, %v35, %v39
    %v44 = vand.u32 2147483647, %v33
    %vm45 = vcmp.eq.f32.partialorder %v44, 8.507059e+37
    %v46 = vand.u32 %v33, 2147483648
    %v47 = vor.u32 1.1754944e-38, %v46
    %v48 = vsel %vm45, %v47, %v43
    %v49 = vmul.f32 1.0, %v48
    %v50 = vrcp.pop %v34
    %v51 = vmul.f32 %v34, %v50
    %v52 = vsub.f32 1.0, %v51
    %v53 = vmul.f32 %v50, %v52
    %v54 = vadd.f32 %v50, %v53
    %vm55 = vweird.f32 %v34
    %vm56 = vweird.f32 %v50
    %vm57 = vmor %vm55, %vm56
    %v58 = vsel %vm57, %v50, %v54
    %v59 = vand.u32 2147483647, %v34
    %vm60 = vcmp.eq.f32.partialorder %v59, 8.507059e+37
    %v61 = vand.u32 %v34, 2147483648
    %v62 = vor.u32 1.1754944e-38, %v61
    %v63 = vsel %vm60, %v62, %v58
    %v64 = vmul.f32 1.0, %v63
    %v65 = vmul.f32 %v23, %v49
    %v66 = vmul.f32 %v24, %v64
    %67 = vst [vmem:[#allocation5] sm:$0xff] %v65
    %68 = vst [vmem:[#allocation5 + $0x8] sm:$0xff] %v66
    // Predicated region
    $region10: #{tpu_custom_call.1} parent=1 // pred_check
      _
    $region11: #{tpu_custom_call.1} parent=1 // pred_check_branch
      %70 = sbr.rel (0) target = $region13
    $region12: #{tpu_custom_call.1} parent=1 // pred_region
      %72 = vsyncadd [#allocation4], 0
      %s74 = sshll.u32 [#allocation5], 4
      %s75 = int_to_ptr.vmem [resolvable:$true] %s74
      %s76 = sshll.u32 %s1, 4
      %s77 = int_to_ptr.hbm [resolvable:$true] %s76
      %79 = dma.vmem_to_hbm [thread:$0]  %s75, 256, %s77, [#allocation4]
    $region13: #{tpu_custom_call.1} parent=1 // pred_fallthru
      _
    // Predicated region
    $region14: #{tpu_custom_call.1} parent=1 // pred_check
      _
    $region15: #{tpu_custom_call.1} parent=1 // pred_check_branch
      %81 = sbr.rel (0) target = $region17
    $region16: #{tpu_custom_call.1} parent=1 // pred_region
      %83 = dma.done [#allocation4], 256
    $region17: #{tpu_custom_call.1} parent=1 // pred_fallthru
      _
    %84 = vsyncpa [#allocation3], 1
    %85 = vsyncpa [#allocation4], 1

</llo_original>
